<compile_context>
chip_gen: v5e
topology: v5e:2x2
jax: 0.10.0
libtpu: 0.0.40
codegen_flags: <defaults>
</compile_context>

<pallas_src>
import functools

import numpy as np
import jax
import jax.numpy as jnp
from jax.experimental import pallas as pl
from jax.experimental.pallas import tpu as pltpu

_BN_EPS = 1e-5


# ----------------------------------------------------------------------------
# Pallas kernel: one grid step == one batch element.
# ----------------------------------------------------------------------------
def _fused_kernel(*refs, dil, stride):
    if stride == 1:
        (xs_ref, rh_d_ref, kw_d_ref, m1_ref, b1_ref,
         m2_ref, b2_ref, rh_u_ref, o_ref) = refs
    else:
        (xs_ref, rh_d_ref, kw_d_ref, m1_ref, b1_ref,
         m2_ref, b2_ref, o_ref) = refs
        rh_u_ref = None

    f32, bf16 = jnp.float32, jnp.bfloat16

    def stack_taps(a):
        """(R, K) f32 -> (R, 3K) bf16: [row-shift -dil | center | row-shift +dil].

        Zero-padded row shifts done with static slices + concat (VPU/XLU slots,
        free while the MXU is the bottleneck) instead of permutation matmuls.
        """
        zpad = jnp.zeros((dil, a.shape[1]), f32)
        minus = jnp.concatenate([zpad, a[:-dil, :]], axis=0)   # s[h] = a[h - dil]
        plus = jnp.concatenate([a[dil:, :], zpad], axis=0)     # s[h] = a[h + dil]
        return jnp.concatenate([minus, a, plus], axis=1).astype(bf16)

    # --- bilinear downsample (align_corners=True), separable, on the MXU ----
    zr = jnp.dot(rh_d_ref[...], xs_ref[...], preferred_element_type=f32)       # (Hd, Cin*W)
    z = jnp.dot(zr.astype(bf16), kw_d_ref[...], preferred_element_type=f32)    # (Hd, Cin*Wd)

    # --- conv1 (BN1 scale folded into weights) + bias + relu, one matmul ----
    c1 = jnp.dot(stack_taps(z), m1_ref[...], preferred_element_type=f32)       # (Hd, Cout*Wd)
    c1 = jnp.maximum(c1 + b1_ref[...], 0.0)

    # --- conv2 (BN2 scale folded; width-upsample folded at stride==1) -------
    c2 = jnp.dot(stack_taps(c1), m2_ref[...], preferred_element_type=f32)

    if stride == 1:
        # Row upsample back to H (the per-channel bias commutes with the
        # bilinear resize, so it is added after), then the final ReLU.
        u = jnp.dot(rh_u_ref[...], c2.astype(bf16), preferred_element_type=f32)
        o_ref[...] = jnp.maximum(u + b2_ref[...], 0.0).astype(o_ref.dtype)
    else:
        o_ref[...] = jnp.maximum(c2 + b2_ref[...], 0.0).astype(o_ref.dtype)


# ----------------------------------------------------------------------------
# Host-side (trace-time) constant builders
# ----------------------------------------------------------------------------
def _interp_matrix(in_size, out_size):
    """1-D bilinear interpolation matrix (out, in), align_corners=True (PyTorch)."""
    if out_size == 1:
        m = np.zeros((1, in_size), np.float32)
        m[0, 0] = 1.0
        return m
    src = np.arange(out_size, dtype=np.float64) * (in_size - 1) / (out_size - 1)
    i0 = np.clip(np.floor(src).astype(np.int64), 0, in_size - 1)
    i1 = np.clip(i0 + 1, 0, in_size - 1)
    frac = src - i0
    m = np.zeros((out_size, in_size), np.float64)
    m[np.arange(out_size), i0] += 1.0 - frac
    m[np.arange(out_size), i1] += frac
    return m.astype(np.float32)


def _w_tap_selector(Wd, dil):
    """(3, Wd, Wd): T[dx, wi, wo] = 1 iff wi == wo + (dx-1)*dil (in range)."""
    t = np.zeros((3, Wd, Wd), np.float32)
    for dx in range(3):
        for wo in range(Wd):
            wi = wo + (dx - 1) * dil
            if 0 <= wi < Wd:
                t[dx, wi, wo] = 1.0
    return t


def _fold_bn(gamma, beta, mean, var):
    scale = gamma / jnp.sqrt(var + _BN_EPS)
    bias = beta - mean * scale
    return scale, bias


def _conv_lane_matrix(w, scale, Wd, dil):
    """(Co,Ci,3,3) -> (3*Ci*Wd, Co*Wd) f32 lane matrix.

    Row blocks are the vertical taps dy=0..2 (matching stack_taps ordering);
    the folded-BN scale is baked into the output-channel columns.
    """
    co, ci = int(w.shape[0]), int(w.shape[1])
    tsel = jnp.asarray(_w_tap_selector(Wd, dil))                       # (3, Wd, Wd)
    m = jnp.einsum("oiyx,xvw->yivow", w.astype(jnp.float32), tsel,
                   precision=jax.lax.Precision.HIGHEST)                # (3,Ci,Wd,Co,Wd)
    m = m * scale.astype(jnp.float32)[None, None, None, :, None]
    return m.reshape(3 * ci * Wd, co * Wd)


# ----------------------------------------------------------------------------
# Wrapper
# ----------------------------------------------------------------------------
def basic_residual_downup_2x(x, params, stride=1, dilation=1):
    """Pallas forward of BasicResidual_downup_2x (ratio=(1,1), groups=1, eval BN)."""
    assert stride in (1, 2)
    if stride == 2:
        dilation = 1
    dil = dilation
    B, C_in, H, W = x.shape
    C_out = int(params["w1"].shape[0])
    Hd, Wd = H // 2, W // 2

    s1, b1 = _fold_bn(params["bn1_gamma"], params["bn1_beta"],
                      params["bn1_mean"], params["bn1_var"])
    s2, b2 = _fold_bn(params["bn2_gamma"], params["bn2_beta"],
                      params["bn2_mean"], params["bn2_var"])

    bf16 = jnp.bfloat16

    # Per-batch lane slab (H, C_in*W) in bf16.
    # TODO(synk): fold this NCHW -> (H, C*W) layout transform (and the inverse
    # on the output) into the BlockSpecs to avoid two extra HBM passes.
    xs = jnp.transpose(x, (0, 2, 1, 3)).reshape(B, H, C_in * W).astype(bf16)

    # Resize matrices — de-batched: block-diagonal over channels only.
    rh_d = jnp.asarray(_interp_matrix(H, Hd)).astype(bf16)                    # (Hd, H)
    kw_d = jnp.asarray(np.kron(np.eye(C_in, dtype=np.float32),
                               _interp_matrix(W, Wd).T)).astype(bf16)         # (Cin*W, Cin*Wd)

    # Conv lane matrices with BN scale folded into their columns.
    m1 = _conv_lane_matrix(params["w1"], s1, Wd, dil).astype(bf16)            # (3*Cin*Wd, Cout*Wd)
    b1l = jnp.repeat(b1.astype(jnp.float32), Wd)[None, :]                     # (1, Cout*Wd)
    m2_base = _conv_lane_matrix(params["w2"], s2, Wd, dil)                    # (3*Cout*Wd, Cout*Wd)

    cparams = pltpu.CompilerParams(dimension_semantics=("parallel",))
    lane_in = C_in * W

    if stride == 1:
        # Fold the width-upsample lane matmul into conv2's weights.
        kw_u = jnp.asarray(np.kron(np.eye(C_out, dtype=np.float32),
                                   _interp_matrix(Wd, W).T))                  # (Cout*Wd, Cout*W)
        m2 = jnp.dot(m2_base, kw_u,
                     precision=jax.lax.Precision.HIGHEST).astype(bf16)        # (3*Cout*Wd, Cout*W)
        b2l = jnp.repeat(b2.astype(jnp.float32), W)[None, :]                  # (1, Cout*W)
        rh_u = jnp.asarray(_interp_matrix(Hd, H)).astype(bf16)                # (H, Hd)

        H_out, lane_out = H, C_out * W
        args = (xs, rh_d, kw_d, m1, b1l, m2, b2l, rh_u)
        in_specs = [
            pl.BlockSpec((None, H, lane_in), lambda b: (b, 0, 0)),
            pl.BlockSpec((Hd, H), lambda b: (0, 0)),
            pl.BlockSpec((C_in * W, C_in * Wd), lambda b: (0, 0)),
            pl.BlockSpec((3 * C_in * Wd, C_out * Wd), lambda b: (0, 0)),
            pl.BlockSpec((1, C_out * Wd), lambda b: (0, 0)),
            pl.BlockSpec((3 * C_out * Wd, lane_out), lambda b: (0, 0)),
            pl.BlockSpec((1, lane_out), lambda b: (0, 0)),
            pl.BlockSpec((H, Hd), lambda b: (0, 0)),
        ]
    else:
        m2 = m2_base.astype(bf16)                                             # (3*Cout*Wd, Cout*Wd)
        b2l = jnp.repeat(b2.astype(jnp.float32), Wd)[None, :]                 # (1, Cout*Wd)

        H_out, lane_out = Hd, C_out * Wd
        args = (xs, rh_d, kw_d, m1, b1l, m2, b2l)
        in_specs = [
            pl.BlockSpec((None, H, lane_in), lambda b: (b, 0, 0)),
            pl.BlockSpec((Hd, H), lambda b: (0, 0)),
            pl.BlockSpec((C_in * W, C_in * Wd), lambda b: (0, 0)),
            pl.BlockSpec((3 * C_in * Wd, C_out * Wd), lambda b: (0, 0)),
            pl.BlockSpec((1, C_out * Wd), lambda b: (0, 0)),
            pl.BlockSpec((3 * C_out * Wd, lane_out), lambda b: (0, 0)),
            pl.BlockSpec((1, lane_out), lambda b: (0, 0)),
        ]

    kernel = functools.partial(_fused_kernel, dil=dil, stride=stride)
    y = pl.pallas_call(
        kernel,
        grid=(B,),
        in_specs=in_specs,
        out_specs=pl.BlockSpec((None, H_out, lane_out), lambda b: (b, 0, 0)),
        out_shape=jax.ShapeDtypeStruct((B, H_out, lane_out), jnp.float32),
        compiler_params=cparams,
    )(*args)

    out = y.reshape(B, H_out, C_out, lane_out // C_out).transpose(0, 2, 1, 3)
    return out.astype(x.dtype)


# ----------------------------------------------------------------------------
# Pure-JAX reference (independent formulation) for validation
# ----------------------------------------------------------------------------
def _ref_interp(x, out_hw):
    _, _, Hin, Win = x.shape
    Ho, Wo = out_hw

    def coords(I, O):
        src = jnp.arange(O, dtype=jnp.float32) * (I - 1) / max(O - 1, 1)
        i0 = jnp.clip(jnp.floor(src).astype(jnp.int32), 0, I - 1)
        i1 = jnp.clip(i0 + 1, 0, I - 1)
        return i0, i1, src - i0

    h0, h1, fh = coords(Hin, Ho)
    w0, w1, fw = coords(Win, Wo)
    xh = (x[:, :, h0, :] * (1 - fh)[None, None, :, None]
          + x[:, :, h1, :] * fh[None, None, :, None])
    return (xh[:, :, :, w0] * (1 - fw)[None, None, None, :]
            + xh[:, :, :, w1] * fw[None, None, None, :])


def _ref_conv_bn(x, w, scale, bias, dilation, relu):
    y = jax.lax.conv_general_dilated(
        x, w, window_strides=(1, 1),
        padding=[(dilation, dilation), (dilation, dilation)],
        rhs_dilation=(dilation, dilation),
        dimension_numbers=("NCHW", "OIHW", "NCHW"),
        precision=jax.lax.Precision.HIGHEST)
    y = y * scale[None, :, None, None] + bias[None, :, None, None]
    return jnp.maximum(y, 0.0) if relu else y


def ref_forward(x, params, stride=1, dilation=1):
    if stride == 2:
        dilation = 1
    B, C_in, H, W = x.shape
    s1, b1 = _fold_bn(params["bn1_gamma"], params["bn1_beta"],
                      params["bn1_mean"], params["bn1_var"])
    s2, b2 = _fold_bn(params["bn2_gamma"], params["bn2_beta"],
                      params["bn2_mean"], params["bn2_var"])
    out = _ref_interp(x, (H // 2, W // 2))
    out = _ref_conv_bn(out, params["w1"], s1, b1, dilation, relu=True)
    out = _ref_conv_bn(out, params["w2"], s2, b2, dilation, relu=(stride == 2))
    if stride == 1:
        out = _ref_interp(out, (H, W))
        out = jnp.maximum(out, 0.0)
    return out


# ----------------------------------------------------------------------------
if __name__ == "__main__":
    B, C_in, C_out, H, W = 2, 4, 8, 16, 16

    key = jax.random.PRNGKey(0)
    kx, k1, k2 = jax.random.split(key, 3)
    x = jax.random.normal(kx, (B, C_in, H, W), jnp.float32)

    arange_out = jnp.arange(C_out, dtype=jnp.float32)
    params = {
        "w1": 0.2 * jax.random.normal(k1, (C_out, C_in, 3, 3), jnp.float32),
        "w2": 0.2 * jax.random.normal(k2, (C_out, C_out, 3, 3), jnp.float32),
        "bn1_gamma": 1.0 + 0.10 * arange_out,
        "bn1_beta": 0.05 * arange_out,
        "bn1_mean": 0.02 * arange_out,
        "bn1_var": 1.0 + 0.03 * arange_out,
        "bn2_gamma": 1.0 - 0.05 * arange_out,
        "bn2_beta": -0.03 * arange_out,
        "bn2_mean": 0.01 * arange_out,
        "bn2_var": 1.0 + 0.02 * arange_out,
    }

    fwd = jax.jit(basic_residual_downup_2x, static_argnames=("stride", "dilation"))

    # stride == 1 (down -> convs -> up -> relu)
    out1 = jax.block_until_ready(fwd(x, params, stride=1, dilation=1))
    ref1 = jax.block_until_ready(ref_forward(x, params, stride=1, dilation=1))
    assert out1.shape == (B, C_out, H, W), out1.shape
    # bf16 MXU operands (f32 accumulation) vs. HIGHEST-precision f32 reference.
    assert jnp.allclose(out1, ref1, rtol=4e-2, atol=4e-2), (
        "stride=1 max abs diff %g" % float(jnp.max(jnp.abs(out1 - ref1))))

    # stride == 2 (down -> convs -> relu, stays at half resolution)
    out2 = jax.block_until_ready(fwd(x, params, stride=2, dilation=1))
    ref2 = jax.block_until_ready(ref_forward(x, params, stride=2, dilation=1))
    assert out2.shape == (B, C_out, H // 2, W // 2), out2.shape
    assert jnp.allclose(out2, ref2, rtol=4e-2, atol=4e-2), (
        "stride=2 max abs diff %g" % float(jnp.max(jnp.abs(out2 - ref2))))

    print("KERNEL_OK")
</pallas_src>

<mosaic_0001>
module attributes {stable_mosaic.version = 11 : i64} {
  func.func @_fused_kernel(%arg0: i32, %arg1: memref<1x16x64xbf16, #tpu.memory_space<vmem>>, %arg2: memref<8x16xbf16, #tpu.memory_space<vmem>>, %arg3: memref<64x32xbf16, #tpu.memory_space<vmem>>, %arg4: memref<96x64xbf16, #tpu.memory_space<vmem>>, %arg5: memref<1x64xf32, #tpu.memory_space<vmem>>, %arg6: memref<192x128xbf16, #tpu.memory_space<vmem>>, %arg7: memref<1x128xf32, #tpu.memory_space<vmem>>, %arg8: memref<16x8xbf16, #tpu.memory_space<vmem>>, %arg9: memref<1x16x128xf32, #tpu.memory_space<vmem>>) attributes {dimension_semantics = [#tpu.dimension_semantics<parallel>], iteration_bounds = array<i64: 2>, scalar_prefetch = 0 : i64, scratch_operands = 0 : i64, tpu.core_type = #tpu.core_type<tc>, window_params = [{transform_indices = @transform_0, window_bounds = array<i64: 1, 16, 64>}, {pipeline_mode = #tpu.pipeline_mode<synchronous>, transform_indices = @transform_1, window_bounds = array<i64: 8, 16>}, {pipeline_mode = #tpu.pipeline_mode<synchronous>, transform_indices = @transform_2, window_bounds = array<i64: 64, 32>}, {pipeline_mode = #tpu.pipeline_mode<synchronous>, transform_indices = @transform_3, window_bounds = array<i64: 96, 64>}, {pipeline_mode = #tpu.pipeline_mode<synchronous>, transform_indices = @transform_4, window_bounds = array<i64: 1, 64>}, {pipeline_mode = #tpu.pipeline_mode<synchronous>, transform_indices = @transform_5, window_bounds = array<i64: 192, 128>}, {pipeline_mode = #tpu.pipeline_mode<synchronous>, transform_indices = @transform_6, window_bounds = array<i64: 1, 128>}, {pipeline_mode = #tpu.pipeline_mode<synchronous>, transform_indices = @transform_7, window_bounds = array<i64: 16, 8>}, {transform_indices = @transform_8, window_bounds = array<i64: 1, 16, 128>}]} {
    %c0 = arith.constant 0 : index
    %c0_0 = arith.constant 0 : index
    %0 = vector.load %arg2[%c0, %c0_0] : memref<8x16xbf16, #tpu.memory_space<vmem>>, vector<8x16xbf16>
    %c0_1 = arith.constant 0 : index
    %c0_2 = arith.constant 0 : index
    %c0_3 = arith.constant 0 : index
    %1 = vector.load %arg1[%c0_1, %c0_2, %c0_3] : memref<1x16x64xbf16, #tpu.memory_space<vmem>>, vector<1x16x64xbf16>
    %2 = vector.shape_cast %1 : vector<1x16x64xbf16> to vector<16x64xbf16>
    %cst = arith.constant dense<0.000000e+00> : vector<8x64xf32>
    %3 = tpu.matmul %0, %2, %cst {dimension_numbers = #tpu.dot_dimension_numbers<[1], [0], [0], [1], [0, 0, 1, 1], [], []>} : vector<8x16xbf16>, vector<16x64xbf16>, vector<8x64xf32> -> vector<8x64xf32>
    %4 = arith.truncf %3 : vector<8x64xf32> to vector<8x64xbf16>
    %c0_4 = arith.constant 0 : index
    %c0_5 = arith.constant 0 : index
    %5 = vector.load %arg3[%c0_4, %c0_5] : memref<64x32xbf16, #tpu.memory_space<vmem>>, vector<64x32xbf16>
    %cst_6 = arith.constant dense<0.000000e+00> : vector<8x32xf32>
    %6 = tpu.matmul %4, %5, %cst_6 {dimension_numbers = #tpu.dot_dimension_numbers<[1], [0], [0], [1], [0, 0, 1, 1], [], []>} : vector<8x64xbf16>, vector<64x32xbf16>, vector<8x32xf32> -> vector<8x32xf32>
    %cst_7 = arith.constant 0.000000e+00 : f32
    %7 = vector.broadcast %cst_7 : f32 to vector<1x32xf32>
    %8 = vector.extract_strided_slice %6 {offsets = [0, 0], sizes = [7, 32], strides = [1, 1]} : vector<8x32xf32> to vector<7x32xf32>
    %9 = tpu.concatenate %7, %8 in 0 : vector<1x32xf32>, vector<7x32xf32> -> vector<8x32xf32>
    %10 = vector.extract_strided_slice %6 {offsets = [1, 0], sizes = [7, 32], strides = [1, 1]} : vector<8x32xf32> to vector<7x32xf32>
    %11 = tpu.concatenate %10, %7 in 0 : vector<7x32xf32>, vector<1x32xf32> -> vector<8x32xf32>
    %12 = tpu.concatenate %9, %6, %11 in 1 : vector<8x32xf32>, vector<8x32xf32>, vector<8x32xf32> -> vector<8x96xf32>
    %13 = arith.truncf %12 : vector<8x96xf32> to vector<8x96xbf16>
    %c0_8 = arith.constant 0 : index
    %c0_9 = arith.constant 0 : index
    %14 = vector.load %arg4[%c0_8, %c0_9] : memref<96x64xbf16, #tpu.memory_space<vmem>>, vector<96x64xbf16>
    %cst_10 = arith.constant dense<0.000000e+00> : vector<8x64xf32>
    %15 = tpu.matmul %13, %14, %cst_10 {dimension_numbers = #tpu.dot_dimension_numbers<[1], [0], [0], [1], [0, 0, 1, 1], [], []>} : vector<8x96xbf16>, vector<96x64xbf16>, vector<8x64xf32> -> vector<8x64xf32>
    %c0_11 = arith.constant 0 : index
    %c0_12 = arith.constant 0 : index
    %16 = vector.load %arg5[%c0_11, %c0_12] : memref<1x64xf32, #tpu.memory_space<vmem>>, vector<1x64xf32>
    %17 = vector.broadcast %16 : vector<1x64xf32> to vector<8x64xf32>
    %18 = arith.addf %15, %17 : vector<8x64xf32>
    %cst_13 = arith.constant 0.000000e+00 : f32
    %19 = vector.broadcast %cst_13 : f32 to vector<8x64xf32>
    %20 = arith.maximumf %18, %19 : vector<8x64xf32>
    %cst_14 = arith.constant 0.000000e+00 : f32
    %21 = vector.broadcast %cst_14 : f32 to vector<1x64xf32>
    %22 = vector.extract_strided_slice %20 {offsets = [0, 0], sizes = [7, 64], strides = [1, 1]} : vector<8x64xf32> to vector<7x64xf32>
    %23 = tpu.concatenate %21, %22 in 0 : vector<1x64xf32>, vector<7x64xf32> -> vector<8x64xf32>
    %24 = vector.extract_strided_slice %20 {offsets = [1, 0], sizes = [7, 64], strides = [1, 1]} : vector<8x64xf32> to vector<7x64xf32>
    %25 = tpu.concatenate %24, %21 in 0 : vector<7x64xf32>, vector<1x64xf32> -> vector<8x64xf32>
    %26 = tpu.concatenate %23, %20, %25 in 1 : vector<8x64xf32>, vector<8x64xf32>, vector<8x64xf32> -> vector<8x192xf32>
    %27 = arith.truncf %26 : vector<8x192xf32> to vector<8x192xbf16>
    %c0_15 = arith.constant 0 : index
    %c0_16 = arith.constant 0 : index
    %28 = vector.load %arg6[%c0_15, %c0_16] : memref<192x128xbf16, #tpu.memory_space<vmem>>, vector<192x128xbf16>
    %cst_17 = arith.constant dense<0.000000e+00> : vector<8x128xf32>
    %29 = tpu.matmul %27, %28, %cst_17 {dimension_numbers = #tpu.dot_dimension_numbers<[1], [0], [0], [1], [0, 0, 1, 1], [], []>} : vector<8x192xbf16>, vector<192x128xbf16>, vector<8x128xf32> -> vector<8x128xf32>
    %c0_18 = arith.constant 0 : index
    %c0_19 = arith.constant 0 : index
    %30 = vector.load %arg8[%c0_18, %c0_19] : memref<16x8xbf16, #tpu.memory_space<vmem>>, vector<16x8xbf16>
    %31 = arith.truncf %29 : vector<8x128xf32> to vector<8x128xbf16>
    %cst_20 = arith.constant dense<0.000000e+00> : vector<16x128xf32>
    %32 = tpu.matmul %30, %31, %cst_20 {dimension_numbers = #tpu.dot_dimension_numbers<[1], [0], [0], [1], [0, 0, 1, 1], [], []>} : vector<16x8xbf16>, vector<8x128xbf16>, vector<16x128xf32> -> vector<16x128xf32>
    %c0_21 = arith.constant 0 : index
    %c0_22 = arith.constant 0 : index
    %33 = vector.load %arg7[%c0_21, %c0_22] : memref<1x128xf32, #tpu.memory_space<vmem>>, vector<1x128xf32>
    %34 = vector.broadcast %33 : vector<1x128xf32> to vector<16x128xf32>
    %35 = arith.addf %32, %34 : vector<16x128xf32>
    %cst_23 = arith.constant 0.000000e+00 : f32
    %36 = vector.broadcast %cst_23 : f32 to vector<16x128xf32>
    %37 = arith.maximumf %35, %36 : vector<16x128xf32>
    %c0_24 = arith.constant 0 : index
    %c0_25 = arith.constant 0 : index
    %c0_26 = arith.constant 0 : index
    %38 = vector.load %arg9[%c0_24, %c0_25, %c0_26] : memref<1x16x128xf32, #tpu.memory_space<vmem>>, vector<1x16x128xf32>
    %39 = vector.shape_cast %38 : vector<1x16x128xf32> to vector<16x128xf32>
    %40 = vector.shape_cast %37 : vector<16x128xf32> to vector<1x16x128xf32>
    tpu.vector_store %arg9[%c0_24, %c0_25, %c0_26], %40 {strides = array<i32>} : memref<1x16x128xf32, #tpu.memory_space<vmem>>, vector<1x16x128xf32>,
    return
  }
  func.func @transform_0(%arg0: i32) -> (i32, i32, i32) {
    %c0_i32 = arith.constant 0 : i32
    %c0_i32_0 = arith.constant 0 : i32
    %c0_i32_1 = arith.constant 0 : i32
    return %arg0, %c0_i32, %c0_i32_0 : i32, i32, i32
  }
  func.func @transform_1(%arg0: i32) -> (i32, i32) {
    %c0_i32 = arith.constant 0 : i32
    %c0_i32_0 = arith.constant 0 : i32
    %c0_i32_1 = arith.constant 0 : i32
    return %c0_i32, %c0_i32_0 : i32, i32
  }
  func.func @transform_2(%arg0: i32) -> (i32, i32) {
    %c0_i32 = arith.constant 0 : i32
    %c0_i32_0 = arith.constant 0 : i32
    %c0_i32_1 = arith.constant 0 : i32
    return %c0_i32, %c0_i32_0 : i32, i32
  }
  func.func @transform_3(%arg0: i32) -> (i32, i32) {
    %c0_i32 = arith.constant 0 : i32
    %c0_i32_0 = arith.constant 0 : i32
    %c0_i32_1 = arith.constant 0 : i32
    return %c0_i32, %c0_i32_0 : i32, i32
  }
  func.func @transform_4(%arg0: i32) -> (i32, i32) {
    %c0_i32 = arith.constant 0 : i32
    %c0_i32_0 = arith.constant 0 : i32
    %c0_i32_1 = arith.constant 0 : i32
    return %c0_i32, %c0_i32_0 : i32, i32
  }
  func.func @transform_5(%arg0: i32) -> (i32, i32) {
    %c0_i32 = arith.constant 0 : i32
    %c0_i32_0 = arith.constant 0 : i32
    %c0_i32_1 = arith.constant 0 : i32
    return %c0_i32, %c0_i32_0 : i32, i32
  }
  func.func @transform_6(%arg0: i32) -> (i32, i32) {
    %c0_i32 = arith.constant 0 : i32
    %c0_i32_0 = arith.constant 0 : i32
    %c0_i32_1 = arith.constant 0 : i32
    return %c0_i32, %c0_i32_0 : i32, i32
  }
  func.func @transform_7(%arg0: i32) -> (i32, i32) {
    %c0_i32 = arith.constant 0 : i32
    %c0_i32_0 = arith.constant 0 : i32
    %c0_i32_1 = arith.constant 0 : i32
    return %c0_i32, %c0_i32_0 : i32, i32
  }
  func.func @transform_8(%arg0: i32) -> (i32, i32, i32) {
    %c0_i32 = arith.constant 0 : i32
    %c0_i32_0 = arith.constant 0 : i32
    %c0_i32_1 = arith.constant 0 : i32
    return %arg0, %c0_i32, %c0_i32_0 : i32, i32, i32
  }
}

</mosaic_0001>

<llo_original>
// kernel: basic_residual_downup_2x.1
$region0: #{basic_residual_downup_2x.1}
  #allocation0 [shape = 'u32[]', space=smem, size = 0x4, offset = 0x4, fixed_abs, tag = 'smem constant byte address 0x4 - core index']
  #allocation1 [shape = 'u32[72,128]{1,0:T(1,128)}', space=vmem, size = 0x9000, scoped, tag = 'internal scratch']
  %s0 = inlined_call_operand.vmem [shape: bf16[2,16,64], index: 0, kind: input, shape index: {}]
  %s1 = inlined_call_operand.vmem [shape: bf16[8,16], index: 1, kind: input, shape index: {}]
  %s2 = inlined_call_operand.vmem [shape: bf16[64,32], index: 2, kind: input, shape index: {}]
  %s3 = inlined_call_operand.vmem [shape: bf16[96,64], index: 3, kind: input, shape index: {}]
  %s4 = inlined_call_operand.vmem [shape: f32[1,64], index: 4, kind: input, shape index: {}]
  %s5 = inlined_call_operand.vmem [shape: bf16[192,128], index: 5, kind: input, shape index: {}]
  %s6 = inlined_call_operand.vmem [shape: f32[1,128], index: 6, kind: input, shape index: {}]
  %s7 = inlined_call_operand.vmem [shape: bf16[16,8], index: 7, kind: input, shape index: {}]
  %s8 = inlined_call_operand.vmem [shape: f32[2,16,128], index: 8, kind: output, shape index: {}]
  %s9 = sld [smem:[#allocation0]]
  $region65: #{basic_residual_downup_2x.1} parent=0
    _
  %s11 = ssub.s32 1, %s9
  %s12 = scalar_select 0, %s11, %s9
  loop: start=0, step=1, limit=4
  $region2: #{basic_residual_downup_2x.1} parent=0 // loop_pre_header
    _
  $region3: #{basic_residual_downup_2x.1} parent=0 // loop_header
    %s14 = sphi 0, %s18
    %p15 = scmp.ge.s32.totalorder %s14, 4
    %s24 = sphi 0, %s26
    %s27 = sphi 0, %s24
    %s28 = sphi 0, %s27
    %s44 = sphi 0, %s28
    %s48 = sphi 0, %s48
    %s50 = sphi 0, %s48
    %s51 = sphi 0, %s50
    %s65 = sphi 0, %s51
    %s69 = sphi 0, %s69
    %s71 = sphi 0, %s69
    %s72 = sphi 0, %s71
    %s86 = sphi 0, %s72
    %s90 = sphi 0, %s90
    %s92 = sphi 0, %s90
    %s93 = sphi 0, %s92
    %s107 = sphi 0, %s93
    %s111 = sphi 0, %s111
    %s113 = sphi 0, %s111
    %s114 = sphi 0, %s113
    %s128 = sphi 0, %s114
    %s132 = sphi 0, %s132
    %s134 = sphi 0, %s132
    %s135 = sphi 0, %s134
    %s149 = sphi 0, %s135
    %s153 = sphi 0, %s153
    %s155 = sphi 0, %s153
    %s156 = sphi 0, %s155
    %s170 = sphi 0, %s156
    %s174 = sphi 0, %s174
    %s176 = sphi 0, %s174
    %s177 = sphi 0, %s176
    %s191 = sphi 0, %s177
    %s197 = sphi 0, %s199
    %s200 = sphi 0, %s197
    %s201 = sphi 0, %s200
    %s217 = sphi 0, %s201
  $region4: #{basic_residual_downup_2x.1} parent=0 // loop_header_branch
    %17 = sbr.rel (%p15) target = $region8
  $region5: #{basic_residual_downup_2x.1} parent=0 // loop_body
    %s19 = ssub.s32 %s14, 1
    %s20 = ssub.s32 %s14, 2
    %s21 = sadd.s32 %s14, 1
    %s22 = ssub.s32 %s14, %s21
    %p23 = scmp.eq.s32.totalorder %s22, 0
    %s25 = sadd.s32 %s24, 1
    %s26 = scalar_select %p23, %s24, %s25
    %p29 = pneg %p23
    %p30 = scmp.eq.s32.totalorder %s14, 1
    %p31 = por %p29, %p30
    %p32 = scmp.ne.s32.totalorder %s24, %s27
    %p33 = scmp.eq.s32.totalorder %s14, 0
    %p34 = por %p32, %p33
    %p35 = scmp.ne.s32.totalorder %s24, %s27
    %p36 = scmp.eq.s32.totalorder %s19, 1
    %p37 = por %p35, %p36
    %p38 = scmp.ne.s32.totalorder %s27, %s28
    %p39 = scmp.eq.s32.totalorder %s19, 0
    %p40 = por %p38, %p39
    %p41 = scmp.ne.s32.totalorder %s27, %s28
    %p42 = scmp.eq.s32.totalorder %s20, 1
    %p43 = por %p41, %p42
    %p45 = scmp.ne.s32.totalorder %s28, %s44
    %p46 = scmp.eq.s32.totalorder %s20, 0
    %p47 = por %p45, %p46
    %s49 = sadd.s32 %s48, 1
    %p52 = scmp.eq.s32.totalorder %s14, 1
    %p53 = scmp.ne.s32.totalorder %s48, %s50
    %p54 = scmp.eq.s32.totalorder %s14, 0
    %p55 = por %p53, %p54
    %p56 = scmp.ne.s32.totalorder %s48, %s50
    %p57 = scmp.eq.s32.totalorder %s19, 1
    %p58 = por %p56, %p57
    %p59 = scmp.ne.s32.totalorder %s50, %s51
    %p60 = scmp.eq.s32.totalorder %s19, 0
    %p61 = por %p59, %p60
    %p62 = scmp.ne.s32.totalorder %s50, %s51
    %p63 = scmp.eq.s32.totalorder %s20, 1
    %p64 = por %p62, %p63
    %p66 = scmp.ne.s32.totalorder %s51, %s65
    %p67 = scmp.eq.s32.totalorder %s20, 0
    %p68 = por %p66, %p67
    %s70 = sadd.s32 %s69, 1
    %p73 = scmp.eq.s32.totalorder %s14, 1
    %p74 = scmp.ne.s32.totalorder %s69, %s71
    %p75 = scmp.eq.s32.totalorder %s14, 0
    %p76 = por %p74, %p75
    %p77 = scmp.ne.s32.totalorder %s69, %s71
    %p78 = scmp.eq.s32.totalorder %s19, 1
    %p79 = por %p77, %p78
    %p80 = scmp.ne.s32.totalorder %s71, %s72
    %p81 = scmp.eq.s32.totalorder %s19, 0
    %p82 = por %p80, %p81
    %p83 = scmp.ne.s32.totalorder %s71, %s72
    %p84 = scmp.eq.s32.totalorder %s20, 1
    %p85 = por %p83, %p84
    %p87 = scmp.ne.s32.totalorder %s72, %s86
    %p88 = scmp.eq.s32.totalorder %s20, 0
    %p89 = por %p87, %p88
    %s91 = sadd.s32 %s90, 1
    %p94 = scmp.eq.s32.totalorder %s14, 1
    %p95 = scmp.ne.s32.totalorder %s90, %s92
    %p96 = scmp.eq.s32.totalorder %s14, 0
    %p97 = por %p95, %p96
    %p98 = scmp.ne.s32.totalorder %s90, %s92
    %p99 = scmp.eq.s32.totalorder %s19, 1
    %p100 = por %p98, %p99
    %p101 = scmp.ne.s32.totalorder %s92, %s93
    %p102 = scmp.eq.s32.totalorder %s19, 0
    %p103 = por %p101, %p102
    %p104 = scmp.ne.s32.totalorder %s92, %s93
    %p105 = scmp.eq.s32.totalorder %s20, 1
    %p106 = por %p104, %p105
    %p108 = scmp.ne.s32.totalorder %s93, %s107
    %p109 = scmp.eq.s32.totalorder %s20, 0
    %p110 = por %p108, %p109
    %s112 = sadd.s32 %s111, 1
    %p115 = scmp.eq.s32.totalorder %s14, 1
    %p116 = scmp.ne.s32.totalorder %s111, %s113
    %p117 = scmp.eq.s32.totalorder %s14, 0
    %p118 = por %p116, %p117
    %p119 = scmp.ne.s32.totalorder %s111, %s113
    %p120 = scmp.eq.s32.totalorder %s19, 1
    %p121 = por %p119, %p120
    %p122 = scmp.ne.s32.totalorder %s113, %s114
    %p123 = scmp.eq.s32.totalorder %s19, 0
    %p124 = por %p122, %p123
    %p125 = scmp.ne.s32.totalorder %s113, %s114
    %p126 = scmp.eq.s32.totalorder %s20, 1
    %p127 = por %p125, %p126
    %p129 = scmp.ne.s32.totalorder %s114, %s128
    %p130 = scmp.eq.s32.totalorder %s20, 0
    %p131 = por %p129, %p130
    %s133 = sadd.s32 %s132, 1
    %p136 = scmp.eq.s32.totalorder %s14, 1
    %p137 = scmp.ne.s32.totalorder %s132, %s134
    %p138 = scmp.eq.s32.totalorder %s14, 0
    %p139 = por %p137, %p138
    %p140 = scmp.ne.s32.totalorder %s132, %s134
    %p141 = scmp.eq.s32.totalorder %s19, 1
    %p142 = por %p140, %p141
    %p143 = scmp.ne.s32.totalorder %s134, %s135
    %p144 = scmp.eq.s32.totalorder %s19, 0
    %p145 = por %p143, %p144
    %p146 = scmp.ne.s32.totalorder %s134, %s135
    %p147 = scmp.eq.s32.totalorder %s20, 1
    %p148 = por %p146, %p147
    %p150 = scmp.ne.s32.totalorder %s135, %s149
    %p151 = scmp.eq.s32.totalorder %s20, 0
    %p152 = por %p150, %p151
    %s154 = sadd.s32 %s153, 1
    %p157 = scmp.eq.s32.totalorder %s14, 1
    %p158 = scmp.ne.s32.totalorder %s153, %s155
    %p159 = scmp.eq.s32.totalorder %s14, 0
    %p160 = por %p158, %p159
    %p161 = scmp.ne.s32.totalorder %s153, %s155
    %p162 = scmp.eq.s32.totalorder %s19, 1
    %p163 = por %p161, %p162
    %p164 = scmp.ne.s32.totalorder %s155, %s156
    %p165 = scmp.eq.s32.totalorder %s19, 0
    %p166 = por %p164, %p165
    %p167 = scmp.ne.s32.totalorder %s155, %s156
    %p168 = scmp.eq.s32.totalorder %s20, 1
    %p169 = por %p167, %p168
    %p171 = scmp.ne.s32.totalorder %s156, %s170
    %p172 = scmp.eq.s32.totalorder %s20, 0
    %p173 = por %p171, %p172
    %s175 = sadd.s32 %s174, 1
    %p178 = scmp.eq.s32.totalorder %s14, 1
    %p179 = scmp.ne.s32.totalorder %s174, %s176
    %p180 = scmp.eq.s32.totalorder %s14, 0
    %p181 = por %p179, %p180
    %p182 = scmp.ne.s32.totalorder %s174, %s176
    %p183 = scmp.eq.s32.totalorder %s19, 1
    %p184 = por %p182, %p183
    %p185 = scmp.ne.s32.totalorder %s176, %s177
    %p186 = scmp.eq.s32.totalorder %s19, 0
    %p187 = por %p185, %p186
    %p188 = scmp.ne.s32.totalorder %s176, %s177
    %p189 = scmp.eq.s32.totalorder %s20, 1
    %p190 = por %p188, %p189
    %p192 = scmp.ne.s32.totalorder %s177, %s191
    %p193 = scmp.eq.s32.totalorder %s20, 0
    %p194 = por %p192, %p193
    %s195 = ssub.s32 %s14, %s21
    %p196 = scmp.eq.s32.totalorder %s195, 0
    %s198 = sadd.s32 %s197, 1
    %s199 = scalar_select %p196, %s197, %s198
    %p202 = pneg %p196
    %p203 = scmp.eq.s32.totalorder %s14, 1
    %p204 = por %p202, %p203
    %p205 = scmp.ne.s32.totalorder %s197, %s200
    %p206 = scmp.eq.s32.totalorder %s14, 0
    %p207 = por %p205, %p206
    %p208 = scmp.ne.s32.totalorder %s197, %s200
    %p209 = scmp.eq.s32.totalorder %s19, 1
    %p210 = por %p208, %p209
    %p211 = scmp.ne.s32.totalorder %s200, %s201
    %p212 = scmp.eq.s32.totalorder %s19, 0
    %p213 = por %p211, %p212
    %p214 = scmp.ne.s32.totalorder %s200, %s201
    %p215 = scmp.eq.s32.totalorder %s20, 1
    %p216 = por %p214, %p215
    %p218 = scmp.ne.s32.totalorder %s201, %s217
    %p219 = scmp.eq.s32.totalorder %s20, 0
    %p220 = por %p218, %p219
    %p221 = scmp.le.s32.totalorder 1, %s14
    %p222 = scmp.lt.s32.totalorder %s14, 3
    %p223 = pnand %p221, %p222
    %p224 = pneg %p223
    // Predicated region
    $region9: #{basic_residual_downup_2x.1} parent=5 // pred_check
      _
    $region10: #{basic_residual_downup_2x.1} parent=5 // pred_check_branch
      %226 = sbr.rel (%p223) target = $region12
    $region11: #{basic_residual_downup_2x.1} parent=5 // pred_region
      %s227 = ssub.s32 %s14, 1
      // Predicated region
      $region13: #{basic_residual_downup_2x.1} parent=11 // pred_check
        %p228 = pneg %p61
      $region14: #{basic_residual_downup_2x.1} parent=11 // pred_check_branch
        %230 = sbr.rel (%p228) target = $region16
      $region15: #{basic_residual_downup_2x.1} parent=11 // pred_region
        _
      $region16: #{basic_residual_downup_2x.1} parent=11 // pred_fallthru
        _
      // Predicated region
      $region17: #{basic_residual_downup_2x.1} parent=11 // pred_check
        %p231 = pneg %p82
      $region18: #{basic_residual_downup_2x.1} parent=11 // pred_check_branch
        %233 = sbr.rel (%p231) target = $region20
      $region19: #{basic_residual_downup_2x.1} parent=11 // pred_region
        _
      $region20: #{basic_residual_downup_2x.1} parent=11 // pred_fallthru
        _
      // Predicated region
      $region21: #{basic_residual_downup_2x.1} parent=11 // pred_check
        %p234 = pneg %p103
      $region22: #{basic_residual_downup_2x.1} parent=11 // pred_check_branch
        %236 = sbr.rel (%p234) target = $region24
      $region23: #{basic_residual_downup_2x.1} parent=11 // pred_region
        _
      $region24: #{basic_residual_downup_2x.1} parent=11 // pred_fallthru
        _
      // Predicated region
      $region25: #{basic_residual_downup_2x.1} parent=11 // pred_check
        %p237 = pneg %p124
      $region26: #{basic_residual_downup_2x.1} parent=11 // pred_check_branch
        %239 = sbr.rel (%p237) target = $region28
      $region27: #{basic_residual_downup_2x.1} parent=11 // pred_region
        _
      $region28: #{basic_residual_downup_2x.1} parent=11 // pred_fallthru
        _
      // Predicated region
      $region29: #{basic_residual_downup_2x.1} parent=11 // pred_check
        %p240 = pneg %p145
      $region30: #{basic_residual_downup_2x.1} parent=11 // pred_check_branch
        %242 = sbr.rel (%p240) target = $region32
      $region31: #{basic_residual_downup_2x.1} parent=11 // pred_region
        _
      $region32: #{basic_residual_downup_2x.1} parent=11 // pred_fallthru
        _
      // Predicated region
      $region33: #{basic_residual_downup_2x.1} parent=11 // pred_check
        %p243 = pneg %p166
      $region34: #{basic_residual_downup_2x.1} parent=11 // pred_check_branch
        %245 = sbr.rel (%p243) target = $region36
      $region35: #{basic_residual_downup_2x.1} parent=11 // pred_region
        _
      $region36: #{basic_residual_downup_2x.1} parent=11 // pred_fallthru
        _
      // Predicated region
      $region37: #{basic_residual_downup_2x.1} parent=11 // pred_check
        %p246 = pneg %p187
      $region38: #{basic_residual_downup_2x.1} parent=11 // pred_check_branch
        %248 = sbr.rel (%p246) target = $region40
      $region39: #{basic_residual_downup_2x.1} parent=11 // pred_region
        _
      $region40: #{basic_residual_downup_2x.1} parent=11 // pred_fallthru
        _
    $region12: #{basic_residual_downup_2x.1} parent=5 // pred_fallthru
      _
    %p249 = scmp.lt.s32.totalorder %s14, 2
    // Predicated region
    $region41: #{basic_residual_downup_2x.1} parent=5 // pred_check
      %p250 = pneg %p249
    $region42: #{basic_residual_downup_2x.1} parent=5 // pred_check_branch
      %252 = sbr.rel (%p250) target = $region44
    $region43: #{basic_residual_downup_2x.1} parent=5 // pred_region
      // Predicated region
      $region45: #{basic_residual_downup_2x.1} parent=43 // pred_check
        %p253 = pneg %p34
      $region46: #{basic_residual_downup_2x.1} parent=43 // pred_check_branch
        %255 = sbr.rel (%p253) target = $region48
      $region47: #{basic_residual_downup_2x.1} parent=43 // pred_region
        %p256 = scmp.lt.s32.totalorder %s14, 1
        %s257 = scalar_select %p256, %s14, 1
        %s258 = smul.addr %s257, 2
        %s259 = smul.addr %s258, 4
        %s260 = scalar_lea.vmem %s0, %s259
      $region48: #{basic_residual_downup_2x.1} parent=43 // pred_fallthru
        _
    $region44: #{basic_residual_downup_2x.1} parent=5 // pred_fallthru
      _
    %p261 = scmp.le.s32.totalorder 1, %s14
    %p262 = scmp.lt.s32.totalorder %s14, 3
    %p263 = pnand %p261, %p262
    %p264 = pneg %p263
    // Predicated region
    $region49: #{basic_residual_downup_2x.1} parent=5 // pred_check
      _
    $region50: #{basic_residual_downup_2x.1} parent=5 // pred_check_branch
      %266 = sbr.rel (%p263) target = $region52
    $region51: #{basic_residual_downup_2x.1} parent=5 // pred_region
      %s267 = ssub.s32 %s14, 1
      %p268 = scmp.lt.s32.totalorder %s19, 1
      %s269 = scalar_select %p268, %s19, 1
      %s270 = smul.addr %s269, 2
      %s271 = smul.addr %s270, 4
      %s272 = scalar_lea.vmem %s0, %s271
      %p273 = pneg %p40
      %p274 = pneg %p37
      %p275 = pneg %p61
      %p276 = pneg %p58
      %p277 = pneg %p82
      %p278 = pneg %p79
      %p279 = pneg %p103
      %p280 = pneg %p100
      %p281 = pneg %p124
      %p282 = pneg %p121
      %p283 = pneg %p145
      %p284 = pneg %p142
      %p285 = pneg %p166
      %p286 = pneg %p163
      %p287 = pneg %p187
      %p288 = pneg %p184
      %p289 = pneg %p213
      %p290 = pneg %p210
      %p291 = scmp.lt.s32.totalorder %s19, 1
      %s292 = scalar_select %p291, %s19, 1
      %s293 = smul.addr %s292, 2
      %s294 = smul.addr %s293, 8
      %s295 = scalar_lea.vmem %s8, %s294
      %p296 = scmp.lt.s32.totalorder %s19, 1
      %s297 = scalar_select %p296, %s19, 1
      %s298 = smul.addr %s297, 2
      %s299 = smul.addr %s298, 4
      %s300 = scalar_lea.vmem %s0, %s299
      %p301 = scmp.lt.s32.totalorder %s19, 1
      %s302 = scalar_select %p301, %s19, 1
      %s303 = smul.addr %s302, 2
      %s304 = smul.addr %s303, 8
      %s305 = scalar_lea.vmem %s8, %s304
      %v307 = vld [vmem:[%s1] sm:$0xf]
      %v308 = vld [vmem:[%s300] sm:$0xf]
      %v309 = vld [vmem:[%s300 + $0x4] sm:$0xf]
      %v312 = vunpack.c.l.b16 %v308
      %v313 = vunpack.c.l.b16 %v309
      %v314 = vpack.c.b16 %v313, %v312
      %vm316 = vcmask 130048
      %v318 = vsel %vm316, %v307, 0
      %320 = vmatpush.bf16.msra.mxu0 0
      %321 = vmatpush.bf16.msra.mxu0 0
      %322 = vmatpush.bf16.msra.mxu0 0
      %323 = vmatpush.bf16.msra.mxu0 0
      %324 = vmatpush.bf16.msra.mxu0 0
      %325 = vmatpush.bf16.msra.mxu0 0
      %326 = vmatpush.bf16.msra.mxu0 0
      %327 = vmatpush.bf16.msra.mxu0 %v314
      %328 = vmatmul.bf16.gmra.mxu0 %v318
      %v329 = vpop.f32.mrf.mxu0
      %v330 = vadd.f32 0.0, %v329
      %v331 = vpop.f32.mrf.mxu0
      %332 = vdwg.mxu0
      %v333 = vpack.c.bf16 %v330, %v330
      %v334 = vld [vmem:[%s2] sm:$0xf]
      %v335 = vld [vmem:[%s2 + $0x4] sm:$0xf]
      %v336 = vld [vmem:[%s2 + $0x8] sm:$0xf]
      %v337 = vld [vmem:[%s2 + $0xc] sm:$0xf]
      %v338 = vld [vmem:[%s2 + $0x10] sm:$0xf]
      %v339 = vld [vmem:[%s2 + $0x14] sm:$0xf]
      %v340 = vld [vmem:[%s2 + $0x18] sm:$0xf]
      %v341 = vld [vmem:[%s2 + $0x1c] sm:$0xf]
      %v350 = vunpack.c.l.b16 %v334
      %v351 = vunpack.c.l.b16 %v335
      %v352 = vunpack.c.l.b16 %v336
      %v353 = vunpack.c.l.b16 %v337
      %v354 = vunpack.c.l.b16 %v338
      %v355 = vunpack.c.l.b16 %v339
      %v356 = vunpack.c.l.b16 %v340
      %v357 = vunpack.c.l.b16 %v341
      %v358 = vpack.c.b16 %v351, %v350
      %v359 = vpack.c.b16 %v353, %v352
      %v360 = vpack.c.b16 %v355, %v354
      %v361 = vpack.c.b16 %v357, %v356
      %vm366 = vcmask 523264
      %v368 = vsel %vm366, %v333, 0
      %370 = vmatpush.bf16.msra.mxu0 0
      %371 = vmatpush.bf16.msra.mxu0 0
      %372 = vmatpush.bf16.msra.mxu0 0
      %373 = vmatpush.bf16.msra.mxu0 0
      %374 = vmatpush.bf16.msra.mxu0 %v361
      %375 = vmatpush.bf16.msra.mxu0 %v360
      %376 = vmatpush.bf16.msra.mxu0 %v359
      %377 = vmatpush.bf16.msra.mxu0 %v358
      %378 = vmatmul.bf16.gmra.mxu0 %v368
      %v379 = vpop.f32.mrf.mxu0
      %v380 = vadd.f32 0.0, %v379
      %v381 = vpop.f32.mrf.mxu0
      %382 = vdwg.mxu0
      %v384 = vrot.slane %v380, 7
      %vm386 = vcmask 1040384
      %v387 = vsel %vm386, 0.0, %v384
      %v388 = vrot.slane %v380, 1
      %vm390 = vcmask 1046528
      %v391 = vsel %vm390, %v388, 0.0
      %392 = vrot.lane.b32.xlu0 %v380, 32
      %v393 = vpop.permute.xlu0 %392
      %396 = vrot.lane.b32.xlu0 %v391, 64
      %v397 = vpop.permute.xlu0 %396
      %vm399 = vcmask 261120
      %v400 = vsel %vm399, %v387, %v393
      %v401 = vsel %vm366, %v400, %v397
      %v402 = vpack.c.bf16 %v401, %v401
      %v403 = vld [vmem:[%s3] sm:$0xf]
      %v404 = vld [vmem:[%s3 + $0x4] sm:$0xf]
      %v405 = vld [vmem:[%s3 + $0x8] sm:$0xf]
      %v406 = vld [vmem:[%s3 + $0xc] sm:$0xf]
      %v407 = vld [vmem:[%s3 + $0x10] sm:$0xf]
      %v408 = vld [vmem:[%s3 + $0x14] sm:$0xf]
      %v409 = vld [vmem:[%s3 + $0x18] sm:$0xf]
      %v410 = vld [vmem:[%s3 + $0x1c] sm:$0xf]
      %v411 = vld [vmem:[%s3 + $0x20] sm:$0xf]
      %v412 = vld [vmem:[%s3 + $0x24] sm:$0xf]
      %v413 = vld [vmem:[%s3 + $0x28] sm:$0xf]
      %v414 = vld [vmem:[%s3 + $0x2c] sm:$0xf]
      %v415 = vld [vmem:[%s4] sm:$0x1]
      %v417 = vperm.slane %v415, 0
      %v431 = vunpack.c.l.b16 %v403
      %v432 = vunpack.c.l.b16 %v404
      %v433 = vunpack.c.l.b16 %v405
      %v434 = vunpack.c.l.b16 %v406
      %v435 = vunpack.c.l.b16 %v407
      %v436 = vunpack.c.l.b16 %v408
      %v437 = vunpack.c.l.b16 %v409
      %v438 = vunpack.c.l.b16 %v410
      %v439 = vunpack.c.l.b16 %v411
      %v440 = vunpack.c.l.b16 %v412
      %v441 = vunpack.c.l.b16 %v413
      %v442 = vunpack.c.l.b16 %v414
      %v443 = vpack.c.b16 %v432, %v431
      %v444 = vpack.c.b16 %v434, %v433
      %v445 = vpack.c.b16 %v436, %v435
      %v446 = vpack.c.b16 %v438, %v437
      %v447 = vpack.c.b16 %v440, %v439
      %v448 = vpack.c.b16 %v442, %v441
      %vm455 = vcmask 785408
      %v457 = vsel %vm455, %v402, 0
      %459 = vmatpush.bf16.msra.mxu0 0
      %460 = vmatpush.bf16.msra.mxu0 0
      %461 = vmatpush.bf16.msra.mxu0 %v448
      %462 = vmatpush.bf16.msra.mxu0 %v447
      %463 = vmatpush.bf16.msra.mxu0 %v446
      %464 = vmatpush.bf16.msra.mxu0 %v445
      %465 = vmatpush.bf16.msra.mxu0 %v444
      %466 = vmatpush.bf16.msra.mxu0 %v443
      %467 = vmatmul.bf16.gmra.mxu0 %v457
      %v468 = vpop.f32.mrf.mxu0
      %v469 = vadd.f32 %v417, %v468
      %v470 = vpop.f32.mrf.mxu0
      %471 = vdwg.mxu0
      %v472 = vmax.f32 %v469, 0.0
      %v474 = vrot.slane %v472, 7
      %v476 = vsel %vm386, 0.0, %v474
      %v477 = vrot.slane %v472, 1
      %v479 = vsel %vm390, %v477, 0.0
      %480 = vrot.lane.b32.xlu0 %v472, 64
      %v481 = vpop.permute.xlu0 %480
      %v483 = vsel %vm366, %v476, %v481
      %v484 = vpack.c.bf16 %v483, %v483
      %v485 = vpack.c.bf16 %v479, %v479
      %v486 = vld [vmem:[%s5] sm:$0xf]
      %v487 = vld [vmem:[%s5 + $0x4] sm:$0xf]
      %v488 = vld [vmem:[%s5 + $0x8] sm:$0xf]
      %v489 = vld [vmem:[%s5 + $0xc] sm:$0xf]
      %v490 = vld [vmem:[%s5 + $0x10] sm:$0xf]
      %v491 = vld [vmem:[%s5 + $0x14] sm:$0xf]
      %v492 = vld [vmem:[%s5 + $0x18] sm:$0xf]
      %v493 = vld [vmem:[%s5 + $0x1c] sm:$0xf]
      %v494 = vld [vmem:[%s5 + $0x20] sm:$0xf]
      %v495 = vld [vmem:[%s5 + $0x24] sm:$0xf]
      %v496 = vld [vmem:[%s5 + $0x28] sm:$0xf]
      %v497 = vld [vmem:[%s5 + $0x2c] sm:$0xf]
      %v498 = vld [vmem:[%s5 + $0x30] sm:$0xf]
      %v499 = vld [vmem:[%s5 + $0x34] sm:$0xf]
      %v500 = vld [vmem:[%s5 + $0x38] sm:$0xf]
      %v501 = vld [vmem:[%s5 + $0x3c] sm:$0xf]
      %v502 = vld [vmem:[%s5 + $0x40] sm:$0xf]
      %v503 = vld [vmem:[%s5 + $0x44] sm:$0xf]
      %v504 = vld [vmem:[%s5 + $0x48] sm:$0xf]
      %v505 = vld [vmem:[%s5 + $0x4c] sm:$0xf]
      %v506 = vld [vmem:[%s5 + $0x50] sm:$0xf]
      %v507 = vld [vmem:[%s5 + $0x54] sm:$0xf]
      %v508 = vld [vmem:[%s5 + $0x58] sm:$0xf]
      %v509 = vld [vmem:[%s5 + $0x5c] sm:$0xf]
      %v534 = vunpack.c.l.b16 %v486
      %v535 = vunpack.c.l.b16 %v487
      %v536 = vunpack.c.l.b16 %v488
      %v537 = vunpack.c.l.b16 %v489
      %v538 = vunpack.c.l.b16 %v490
      %v539 = vunpack.c.l.b16 %v491
      %v540 = vunpack.c.l.b16 %v492
      %v541 = vunpack.c.l.b16 %v493
      %v542 = vunpack.c.l.b16 %v494
      %v543 = vunpack.c.l.b16 %v495
      %v544 = vunpack.c.l.b16 %v496
      %v545 = vunpack.c.l.b16 %v497
      %v546 = vunpack.c.l.b16 %v498
      %v547 = vunpack.c.l.b16 %v499
      %v548 = vunpack.c.l.b16 %v500
      %v549 = vunpack.c.l.b16 %v501
      %v550 = vunpack.c.l.b16 %v502
      %v551 = vunpack.c.l.b16 %v503
      %v552 = vunpack.c.l.b16 %v504
      %v553 = vunpack.c.l.b16 %v505
      %v554 = vunpack.c.l.b16 %v506
      %v555 = vunpack.c.l.b16 %v507
      %v556 = vunpack.c.l.b16 %v508
      %v557 = vunpack.c.l.b16 %v509
      %v558 = vpack.c.b16 %v535, %v534
      %v559 = vpack.c.b16 %v537, %v536
      %v560 = vpack.c.b16 %v539, %v538
      %v561 = vpack.c.b16 %v541, %v540
      %v562 = vpack.c.b16 %v543, %v542
      %v563 = vpack.c.b16 %v545, %v544
      %v564 = vpack.c.b16 %v547, %v546
      %v565 = vpack.c.b16 %v549, %v548
      %v566 = vpack.c.b16 %v551, %v550
      %v567 = vpack.c.b16 %v553, %v552
      %v568 = vpack.c.b16 %v555, %v554
      %v569 = vpack.c.b16 %v557, %v556
      %v583 = vsel %vm366, %v485, 0
      %585 = vmatpush.bf16.msra.mxu0 %v565
      %586 = vmatpush.bf16.msra.mxu0 %v564
      %587 = vmatpush.bf16.msra.mxu0 %v563
      %588 = vmatpush.bf16.msra.mxu0 %v562
      %589 = vmatpush.bf16.msra.mxu0 %v561
      %590 = vmatpush.bf16.msra.mxu0 %v560
      %591 = vmatpush.bf16.msra.mxu0 %v559
      %592 = vmatpush.bf16.msra.mxu0 %v558
      %593 = vmatmul.bf16.gmra.mxu0 %v484
      %v594 = vpop.f32.mrf.mxu0
      %v595 = vadd.f32 0.0, %v594
      %v596 = vpop.f32.mrf.mxu0
      %597 = vdwg.mxu0
      %598 = vmatpush.bf16.msra.mxu0 0
      %599 = vmatpush.bf16.msra.mxu0 0
      %600 = vmatpush.bf16.msra.mxu0 0
      %601 = vmatpush.bf16.msra.mxu0 0
      %602 = vmatpush.bf16.msra.mxu0 %v569
      %603 = vmatpush.bf16.msra.mxu0 %v568
      %604 = vmatpush.bf16.msra.mxu0 %v567
      %605 = vmatpush.bf16.msra.mxu0 %v566
      %606 = vmatmul.bf16.gmra.mxu0 %v583
      %v607 = vpop.f32.mrf.mxu0
      %v608 = vadd.f32 %v595, %v607
      %v609 = vpop.f32.mrf.mxu0
      %610 = vdwg.mxu0
      %v611 = vld [vmem:[%s7] sm:$0xf]
      %v612 = vld [vmem:[%s7 + $0x4] sm:$0xf]
      %v613 = vpack.c.bf16 %v608, %v608
      %v614 = vld [vmem:[%s6] sm:$0x1]
      %v616 = vperm.slane %v614, 0
      %v620 = vunpack.c.l.b16 %v611
      %v621 = vunpack.c.l.b16 %v612
      %v622 = vpack.c.b16 %v621, %v620
      %vm623 = vcmask 64512
      %v625 = vsel %vm623, %v622, 0
      %vm627 = vcmask 1043456
      %v629 = vsel %vm627, %v613, 0
      %631 = vmatpush.bf16.msra.mxu0 0
      %632 = vmatpush.bf16.msra.mxu0 0
      %633 = vmatpush.bf16.msra.mxu0 0
      %634 = vmatpush.bf16.msra.mxu0 0
      %635 = vmatpush.bf16.msra.mxu0 0
      %636 = vmatpush.bf16.msra.mxu0 0
      %637 = vmatpush.bf16.msra.mxu0 0
      %638 = vmatpush.bf16.msra.mxu0 %v629
      %639 = vmatmul.bf16.gmra.mxu0 %v625
      %v640 = vpop.f32.mrf.mxu0
      %v641 = vadd.f32 %v616, %v640
      %v642 = vpop.f32.mrf.mxu0
      %v643 = vadd.f32 %v616, %v642
      %644 = vdwg.mxu0
      %v645 = vmax.f32 %v641, 0.0
      %v646 = vmax.f32 %v643, 0.0
      %647 = vst [vmem:[%s305] sm:$0xff] %v645
      %648 = vst [vmem:[%s305 + $0x8] sm:$0xff] %v646
      %p649 = scmp.lt.s32.totalorder %s19, 1
      %s650 = scalar_select %p649, %s19, 1
      %s651 = smul.addr %s650, 2
      %s652 = smul.addr %s651, 8
      %s653 = scalar_lea.vmem %s8, %s652
      // Predicated region
      $region53: #{basic_residual_downup_2x.1} parent=51 // pred_check
        %p654 = pneg %p210
      $region54: #{basic_residual_downup_2x.1} parent=51 // pred_check_branch
        %656 = sbr.rel (%p654) target = $region56
      $region55: #{basic_residual_downup_2x.1} parent=51 // pred_region
        _
      $region56: #{basic_residual_downup_2x.1} parent=51 // pred_fallthru
        _
    $region52: #{basic_residual_downup_2x.1} parent=5 // pred_fallthru
      _
    %p657 = scmp.le.s32.totalorder 2, %s14
    // Predicated region
    $region57: #{basic_residual_downup_2x.1} parent=5 // pred_check
      %p658 = pneg %p657
    $region58: #{basic_residual_downup_2x.1} parent=5 // pred_check_branch
      %660 = sbr.rel (%p658) target = $region60
    $region59: #{basic_residual_downup_2x.1} parent=5 // pred_region
      %s661 = ssub.s32 %s14, 2
      // Predicated region
      $region61: #{basic_residual_downup_2x.1} parent=59 // pred_check
        %p662 = pneg %p216
      $region62: #{basic_residual_downup_2x.1} parent=59 // pred_check_branch
        %664 = sbr.rel (%p662) target = $region64
      $region63: #{basic_residual_downup_2x.1} parent=59 // pred_region
        %p665 = scmp.lt.s32.totalorder %s20, 1
        %s666 = scalar_select %p665, %s20, 1
        %s667 = smul.addr %s666, 2
        %s668 = smul.addr %s667, 8
        %s669 = scalar_lea.vmem %s8, %s668
      $region64: #{basic_residual_downup_2x.1} parent=59 // pred_fallthru
        _
    $region60: #{basic_residual_downup_2x.1} parent=5 // pred_fallthru
      _
  $region6: #{basic_residual_downup_2x.1} parent=0 // loop_footer
    %s18 = sadd.s32 1, %s14
  $region7: #{basic_residual_downup_2x.1} parent=0 // loop_footer_branch
    %13 = sbr.rel target = $region3
  $region8: #{basic_residual_downup_2x.1} parent=0 // loop_exit
    _

</llo_original>
